<compile_context>
chip_gen: v6e
topology: v6e:2x2x1
jax: 0.10.0
libtpu: 0.0.40
codegen_flags: <defaults>
</compile_context>

<pallas_src>
import jax
import jax.numpy as jnp
from jax.experimental import pallas as pl
from jax.experimental.pallas import tpu as pltpu


def conv1x1_fused_kernel(x_ref, w_ref, b_ref, o_ref):
    # x_ref: (Cin, bn, Hp*Wp) f32 VMEM — channel-leading: x_ref[c] is a pure
    #        address-offset view (no sublane relayout), lane-dense last dim.
    # w_ref: (Cin,) f32 SMEM scalars; b_ref: (1,) f32 SMEM scalar.
    # o_ref: (bn, Hp*Wp) f32 VMEM.
    cin = x_ref.shape[0]
    acc = x_ref[0] * w_ref[0]
    for c in range(1, cin):                   # Cin == 3, unrolled
        acc = acc + x_ref[c] * w_ref[c]       # scalar-broadcast VPU FMA
    v1 = acc + b_ref[0]                       # 1x1 conv (zero-padded border -> bias)
    v3 = jnp.clip(v1 + 2.0, 0.0, 50.0)
    o_ref[...] = jax.nn.sigmoid(v1 * v3 * (1.0 / 6.0))   # exp on EUP


def model_forward(x, w, b, *, block_n=512):
    """x: (N, Cin, H, W) f32; w: (1, Cin, 1, 1); b: (1,). Returns (N, 1, H+2, W+2)."""
    N, Cin, H, W = x.shape
    Hp, Wp = H + 2, W + 2
    HWp = Hp * Wp

    # Fold the conv's padding=1 into the kernel's input and present it
    # channel-major / lane-dense.  Under jit this is one tiny input-prep
    # fusion; the pallas_call then produces the full padded output in one pass
    # (no lax.pad over the output afterwards).
    xp = jnp.pad(x, ((0, 0), (0, 0), (1, 1), (1, 1)))
    xp = jnp.transpose(xp, (1, 0, 2, 3)).reshape(Cin, N, HWp)
    w_vec = w.reshape(Cin).astype(jnp.float32)
    b_vec = b.reshape(1).astype(jnp.float32)

    bn = min(block_n, N)                      # batch tile (multiple of 8 at scale)
    grid = (pl.cdiv(N, bn),)

    cost = pl.CostEstimate(
        flops=(2 * Cin + 6) * N * HWp,
        transcendentals=N * HWp,
        bytes_accessed=4 * (Cin * N * HWp + N * HWp + Cin + 1),
    )

    out_flat = pl.pallas_call(
        conv1x1_fused_kernel,
        out_shape=jax.ShapeDtypeStruct((N, HWp), jnp.float32),
        grid=grid,
        in_specs=[
            pl.BlockSpec((Cin, bn, HWp), lambda i: (0, i, 0)),
            pl.BlockSpec(memory_space=pltpu.SMEM),
            pl.BlockSpec(memory_space=pltpu.SMEM),
        ],
        out_specs=pl.BlockSpec((bn, HWp), lambda i: (i, 0)),
        compiler_params=pltpu.CompilerParams(
            dimension_semantics=("parallel",),   # shards batch across v7x's 2 TCs
        ),
        cost_estimate=cost,
    )(xp, w_vec, b_vec)

    # (N, Hp*Wp) -> (N, 1, Hp, Wp): contiguous, metadata-only reshape.
    return out_flat.reshape(N, 1, Hp, Wp)


def _reference(x, w, b):
    """Pure-JAX reference of conv(1x1, pad=1) + the elementwise chain."""
    xp = jnp.pad(x, ((0, 0), (0, 0), (1, 1), (1, 1)))
    v1 = jnp.einsum("nchw,oc->nohw", xp, w.reshape(1, -1)) + b.reshape(1, 1, 1, 1)
    v3 = jnp.clip(v1 + 2.0, 0.0, 50.0)
    return jax.nn.sigmoid(v1 * v3 / 6.0)


if __name__ == "__main__":
    key = jax.random.PRNGKey(0)
    kx, kw, kb = jax.random.split(key, 3)

    # small shapes consistent with the module's forward: NCHW, Cin=3
    N, Cin, H, W = 2, 3, 16, 16
    x = jax.random.normal(kx, (N, Cin, H, W), dtype=jnp.float32)

    # deterministic Conv2d(3, 1, 1) parameter init (kaiming-uniform-like bound)
    fan_in = Cin * 1 * 1
    bound = 1.0 / (fan_in ** 0.5)
    w = jax.random.uniform(kw, (1, Cin, 1, 1), minval=-bound, maxval=bound,
                           dtype=jnp.float32)
    b = jax.random.uniform(kb, (1,), minval=-bound, maxval=bound,
                           dtype=jnp.float32)

    fwd = jax.jit(model_forward)
    out = jax.block_until_ready(fwd(x, w, b))
    ref = _reference(x, w, b)
    assert out.shape == (N, 1, H + 2, W + 2)
    assert jnp.allclose(out, ref, atol=1e-5, rtol=1e-5)

    print("KERNEL_OK")
</pallas_src>

<mosaic_0001>
module attributes {stable_mosaic.version = 11 : i64} {
  func.func @conv1x1_fused_kernel(%arg0: i32, %arg1: memref<3x2x324xf32, #tpu.memory_space<vmem>>, %arg2: memref<3xf32, #tpu.memory_space<smem>>, %arg3: memref<1xf32, #tpu.memory_space<smem>>, %arg4: memref<2x324xf32, #tpu.memory_space<vmem>>) attributes {dimension_semantics = [#tpu.dimension_semantics<parallel>], iteration_bounds = array<i64: 1>, scalar_prefetch = 0 : i64, scratch_operands = 0 : i64, tpu.core_type = #tpu.core_type<tc>, window_params = [{transform_indices = @transform_0, window_bounds = array<i64: 3, 2, 324>}, {transform_indices = @transform_1, window_bounds = array<i64: 3>}, {transform_indices = @transform_2, window_bounds = array<i64: 1>}, {transform_indices = @transform_3, window_bounds = array<i64: 2, 324>}]} {
    %c0 = arith.constant 0 : index
    %c0_0 = arith.constant 0 : index
    %c0_1 = arith.constant 0 : index
    %0 = vector.load %arg1[%c0, %c0_0, %c0_1] : memref<3x2x324xf32, #tpu.memory_space<vmem>>, vector<1x2x324xf32>
    %1 = vector.shape_cast %0 : vector<1x2x324xf32> to vector<2x324xf32>
    %c0_2 = arith.constant 0 : index
    %2 = memref.load %arg2[%c0_2] : memref<3xf32, #tpu.memory_space<smem>>
    %3 = vector.broadcast %2 : f32 to vector<2x324xf32>
    %4 = arith.mulf %1, %3 : vector<2x324xf32>
    %c1 = arith.constant 1 : index
    %c0_3 = arith.constant 0 : index
    %c0_4 = arith.constant 0 : index
    %5 = vector.load %arg1[%c1, %c0_3, %c0_4] : memref<3x2x324xf32, #tpu.memory_space<vmem>>, vector<1x2x324xf32>
    %6 = vector.shape_cast %5 : vector<1x2x324xf32> to vector<2x324xf32>
    %c1_5 = arith.constant 1 : index
    %7 = memref.load %arg2[%c1_5] : memref<3xf32, #tpu.memory_space<smem>>
    %8 = vector.broadcast %7 : f32 to vector<2x324xf32>
    %9 = arith.mulf %6, %8 : vector<2x324xf32>
    %10 = arith.addf %4, %9 : vector<2x324xf32>
    %c2 = arith.constant 2 : index
    %c0_6 = arith.constant 0 : index
    %c0_7 = arith.constant 0 : index
    %11 = vector.load %arg1[%c2, %c0_6, %c0_7] : memref<3x2x324xf32, #tpu.memory_space<vmem>>, vector<1x2x324xf32>
    %12 = vector.shape_cast %11 : vector<1x2x324xf32> to vector<2x324xf32>
    %c2_8 = arith.constant 2 : index
    %13 = memref.load %arg2[%c2_8] : memref<3xf32, #tpu.memory_space<smem>>
    %14 = vector.broadcast %13 : f32 to vector<2x324xf32>
    %15 = arith.mulf %12, %14 : vector<2x324xf32>
    %16 = arith.addf %10, %15 : vector<2x324xf32>
    %c0_9 = arith.constant 0 : index
    %17 = memref.load %arg3[%c0_9] : memref<1xf32, #tpu.memory_space<smem>>
    %18 = vector.broadcast %17 : f32 to vector<2x324xf32>
    %19 = arith.addf %16, %18 : vector<2x324xf32>
    %cst = arith.constant 2.000000e+00 : f32
    %20 = vector.broadcast %cst : f32 to vector<2x324xf32>
    %21 = arith.addf %19, %20 : vector<2x324xf32>
    %cst_10 = arith.constant 0.000000e+00 : f32
    %cst_11 = arith.constant 5.000000e+01 : f32
    %22 = vector.broadcast %cst_10 : f32 to vector<2x324xf32>
    %23 = arith.maximumf %22, %21 : vector<2x324xf32>
    %24 = vector.broadcast %cst_11 : f32 to vector<2x324xf32>
    %25 = arith.minimumf %24, %23 : vector<2x324xf32>
    %26 = arith.mulf %19, %25 : vector<2x324xf32>
    %cst_12 = arith.constant 0.166666672 : f32
    %27 = vector.broadcast %cst_12 : f32 to vector<2x324xf32>
    %28 = arith.mulf %26, %27 : vector<2x324xf32>
    %29 = arith.negf %28 : vector<2x324xf32>
    %30 = math.exp %29 : vector<2x324xf32>
    %cst_13 = arith.constant 1.000000e+00 : f32
    %31 = vector.broadcast %cst_13 : f32 to vector<2x324xf32>
    %32 = arith.addf %31, %30 : vector<2x324xf32>
    %33 = arith.divf %31, %32 : vector<2x324xf32>
    %c0_14 = arith.constant 0 : index
    %c0_15 = arith.constant 0 : index
    %34 = vector.load %arg4[%c0_14, %c0_15] : memref<2x324xf32, #tpu.memory_space<vmem>>, vector<2x324xf32>
    tpu.vector_store %arg4[%c0_14, %c0_15], %33 {strides = array<i32>} : memref<2x324xf32, #tpu.memory_space<vmem>>, vector<2x324xf32>,
    return
  }
  func.func @transform_0(%arg0: i32) -> (i32, i32, i32) {
    %c0_i32 = arith.constant 0 : i32
    %c0_i32_0 = arith.constant 0 : i32
    %c0_i32_1 = arith.constant 0 : i32
    return %c0_i32, %arg0, %c0_i32_0 : i32, i32, i32
  }
  func.func @transform_1(%arg0: i32) -> i32 {
    %c0_i32 = arith.constant 0 : i32
    %c0_i32_0 = arith.constant 0 : i32
    return %c0_i32 : i32
  }
  func.func @transform_2(%arg0: i32) -> i32 {
    %c0_i32 = arith.constant 0 : i32
    %c0_i32_0 = arith.constant 0 : i32
    return %c0_i32 : i32
  }
  func.func @transform_3(%arg0: i32) -> (i32, i32) {
    %c0_i32 = arith.constant 0 : i32
    %c0_i32_0 = arith.constant 0 : i32
    return %arg0, %c0_i32 : i32, i32
  }
}

</mosaic_0001>

<llo_original>
// kernel: model_forward.1
$region0: #{model_forward.1}
  #allocation0 [shape = 'u32[]', space=smem, size = 0x4, offset = 0x4, fixed_abs, tag = 'smem constant byte address 0x4 - core index']
  #allocation1 [shape = 'u32[144,128]{1,0:T(1,128)}', space=vmem, size = 0x12000, scoped, tag = 'internal scratch']
  #allocation2 [shape = 'f32[1]{0:T(128)S(6)}', space=smem, size = 0x200, scoped, tag = 'scoped memory for model_forward.1']
  %s0 = inlined_call_operand.vmem [shape: f32[3,2,324], index: 0, kind: input, shape index: {}]
  %s1 = inlined_call_operand.vmem [shape: f32[3], index: 1, kind: input, shape index: {}]
  %s2 = inlined_call_operand.<no memory space> [shape: f32[1], index: 2, kind: input, shape index: {}]
  %s3 = inlined_call_operand.vmem [shape: f32[2,324], index: 3, kind: output, shape index: {}]
  %s4 = sld [smem:[#allocation0]]
  $region26: #{model_forward.1} parent=0
    _
  %s6 = ssub.s32 1, %s4
  %s7 = scalar_select 0, %s6, %s4
  %8 = sst [smem:[#allocation2]] %s2
  $region1: #{model_forward.1} parent=0
    #allocation3 [shape = 'u8[512]{0}', space=smem, size = 0x200, scoped, tag = 'input window, operand 1, single buffered']
    #allocation4 [shape = 's32[1]{0}', space=sflag, size = 0x4, scoped, tag = 'scoped memory for model_forward.1']
    %9 = vsyncpa [#allocation4], 0
    // Predicated region
    $region2: #{model_forward.1} parent=1 // pred_check
      _
    $region3: #{model_forward.1} parent=1 // pred_check_branch
      %11 = sbr.rel (0) target = $region5
    $region4: #{model_forward.1} parent=1 // pred_region
      _
    $region5: #{model_forward.1} parent=1 // pred_fallthru
      _
    // Predicated region
    $region6: #{model_forward.1} parent=1 // pred_check
      _
    $region7: #{model_forward.1} parent=1 // pred_check_branch
      %13 = sbr.rel (0) target = $region9
    $region8: #{model_forward.1} parent=1 // pred_region
      %s15 = ssub.s32 16, 16
      %16 = vsyncadd [#allocation4], %s15
      %s18 = sshll.u32 %s1, 4
      %s19 = int_to_ptr.vmem [resolvable:$true] %s18
      %21 = dma.vmem_to_smem %s19, 16, [#allocation3], [#allocation4]
    $region9: #{model_forward.1} parent=1 // pred_fallthru
      _
    // Predicated region
    $region10: #{model_forward.1} parent=1 // pred_check
      _
    $region11: #{model_forward.1} parent=1 // pred_check_branch
      %23 = sbr.rel (0) target = $region13
    $region12: #{model_forward.1} parent=1 // pred_region
      _
    $region13: #{model_forward.1} parent=1 // pred_fallthru
      _
    // Predicated region
    $region14: #{model_forward.1} parent=1 // pred_check
      _
    $region15: #{model_forward.1} parent=1 // pred_check_branch
      %25 = sbr.rel (0) target = $region17
    $region16: #{model_forward.1} parent=1 // pred_region
      %26 = dma.done [#allocation4], 16
    $region17: #{model_forward.1} parent=1 // pred_fallthru
      _
    %27 = sfence
    %v28 = vld [vmem:[%s0] sm:$0x3f]
    %s29 = sld [smem:[#allocation3]]
    %v30 = vstv %s29
    %v31 = vmul.f32 %v28, %v30
    %s32 = scalar_lea.vmem %s0, 6
    %v33 = vld [vmem:[%s32] sm:$0x3f]
    %s34 = sld [smem:[#allocation3 + $0x1]]
    %v35 = vstv %s34
    %v36 = vmul.f32 %v33, %v35
    %v37 = vadd.f32 %v31, %v36
    %s38 = scalar_lea.vmem %s0, 12
    %v39 = vld [vmem:[%s38] sm:$0x3f]
    %s40 = sld [smem:[#allocation3 + $0x2]]
    %v41 = vstv %s40
    %v42 = vmul.f32 %v39, %v41
    %v43 = vadd.f32 %v37, %v42
    %s44 = sld [smem:[#allocation2]]
    %v45 = vstv %s44
    %v46 = vadd.f32 %v43, %v45
    %v47 = vadd.f32 %v46, 2.0
    %v48 = vmax.f32 %v47, 0.0
    %v49 = vmin.f32 %v48, 50.0
    %v50 = vmul.f32 %v46, %v49
    %v51 = vmul.f32 %v50, 0.16666667
    %v52 = vxor.u32 %v51, 2147483648
    %v53 = vmul.f32 %v52, 1.442695
    %v54 = vpow.pop %v53
    %v55 = vadd.f32 %v54, 1.0
    %v56 = vrcp.pop %v55
    %v57 = vmul.f32 1.0, %v56
    %vm58 = vcmask 1041408
    %vm59 = vcmask 1043458
    %vm60 = vmor %vm59, %vm58
    %vm61 = vcmask 553988
    %vm62 = vmor %vm61, %vm60
    %63 = vst.msk [vmem:[%s3] sm:$0x3f] %vm62, %v57
    // Predicated region
    $region18: #{model_forward.1} parent=1 // pred_check
      _
    $region19: #{model_forward.1} parent=1 // pred_check_branch
      %65 = sbr.rel (0) target = $region21
    $region20: #{model_forward.1} parent=1 // pred_region
      _
    $region21: #{model_forward.1} parent=1 // pred_fallthru
      _
    // Predicated region
    $region22: #{model_forward.1} parent=1 // pred_check
      _
    $region23: #{model_forward.1} parent=1 // pred_check_branch
      %67 = sbr.rel (0) target = $region25
    $region24: #{model_forward.1} parent=1 // pred_region
      _
    $region25: #{model_forward.1} parent=1 // pred_fallthru
      _
    %68 = vsyncpa [#allocation4], 1

</llo_original>
